<compile_context>
chip_gen: v6e
topology: v6e:2x2x1
jax: 0.10.0
libtpu: 0.0.40
codegen_flags: <defaults>
</compile_context>

<pallas_src>
import functools

import jax
import jax.numpy as jnp
from jax.experimental import pallas as pl
from jax.experimental.pallas import tpu as pltpu

LANE = 128  # TPU vreg lane width


def _round_up(n, m):
    return ((n + m - 1) // m) * m


def _self_attention_kernel(x_ref, wq_ref, wk_ref, wv_ref,
                           bq_ref, bk_ref, bv_ref,
                           out_ref, attn_ref, *, scale: float):
    """One batch element per grid step; everything stays in VMEM."""
    x = x_ref[0]                                                     # [S, Ep]

    q = jnp.dot(x, wq_ref[...], preferred_element_type=jnp.float32) + bq_ref[...]
    k = jnp.dot(x, wk_ref[...], preferred_element_type=jnp.float32) + bk_ref[...]
    v = jnp.dot(x, wv_ref[...], preferred_element_type=jnp.float32) + bv_ref[...]

    scores = jnp.dot(q, k.T, preferred_element_type=jnp.float32) * (1.0 / scale)

    # numerically-stable softmax over the key axis
    m = jnp.max(scores, axis=-1, keepdims=True)
    e = jnp.exp(scores - m)
    denom = jnp.sum(e, axis=-1, keepdims=True)
    attn = e / denom                                                 # [S, S]

    out = jnp.dot(attn, v, preferred_element_type=jnp.float32)       # [S, Ep]

    out_ref[0] = out.astype(out_ref.dtype)
    attn_ref[0] = attn.astype(attn_ref.dtype)


def self_attention_pallas(x, wq, bq, wk, bk, wv, bv, *, scale):
    """x: [B, S, E]; w*: [E, E] stored as [in, out]; b*: [1, E].

    Returns (output [B, S, E], attention_weights [B, S, S]).
    """
    B, S, E = x.shape
    Ep = _round_up(E, LANE)
    pad_e = Ep - E

    # Lane-dense padding of the embedding dim (zero pad -> numerically exact).
    x_p = jnp.pad(x, ((0, 0), (0, 0), (0, pad_e)))
    pad_w = lambda w: jnp.pad(w, ((0, pad_e), (0, pad_e)))
    pad_b = lambda b: jnp.pad(b, ((0, 0), (0, pad_e)))
    wq_p, wk_p, wv_p = pad_w(wq), pad_w(wk), pad_w(wv)
    bq_p, bk_p, bv_p = pad_b(bq), pad_b(bk), pad_b(bv)

    kernel = functools.partial(_self_attention_kernel, scale=float(scale))

    flops = B * (3 * 2 * S * Ep * Ep + 2 * 2 * S * S * Ep)
    bytes_accessed = 4 * (B * S * Ep        # x
                          + 3 * Ep * Ep     # weights
                          + 3 * Ep          # biases
                          + B * S * Ep      # output
                          + B * S * S)      # attention weights
    cost = pl.CostEstimate(flops=flops,
                           transcendentals=B * S * S,
                           bytes_accessed=bytes_accessed)

    out_p, attn = pl.pallas_call(
        kernel,
        out_shape=(jax.ShapeDtypeStruct((B, S, Ep), jnp.float32),
                   jax.ShapeDtypeStruct((B, S, S), jnp.float32)),
        grid=(B,),
        in_specs=[
            pl.BlockSpec((1, S, Ep), lambda b: (b, 0, 0)),   # x
            pl.BlockSpec((Ep, Ep), lambda b: (0, 0)),        # Wq
            pl.BlockSpec((Ep, Ep), lambda b: (0, 0)),        # Wk
            pl.BlockSpec((Ep, Ep), lambda b: (0, 0)),        # Wv
            pl.BlockSpec((1, Ep), lambda b: (0, 0)),         # bq
            pl.BlockSpec((1, Ep), lambda b: (0, 0)),         # bk
            pl.BlockSpec((1, Ep), lambda b: (0, 0)),         # bv
        ],
        out_specs=(
            pl.BlockSpec((1, S, Ep), lambda b: (b, 0, 0)),   # output
            pl.BlockSpec((1, S, S), lambda b: (b, 0, 0)),    # attention weights
        ),
        compiler_params=pltpu.CompilerParams(
            dimension_semantics=("parallel",)),               # 2 TCs on v7x
        cost_estimate=cost,
    )(x_p, wq_p, wk_p, wv_p, bq_p, bk_p, bv_p)

    # TODO(synk): attention_weights' last dim is S (=8 here), below the 128-lane
    # width; padding keys would require masking the softmax, so it is left as a
    # (small) masked store.
    return out_p[..., :E], attn


def init_params(key, embed_size):
    """torch.nn.Linear default init: U(-1/sqrt(in), 1/sqrt(in)).

    Weights stored as [in, out] (transposed vs. PyTorch's [out, in]) so the
    kernel computes y = x @ W + b directly on the MXU.
    """
    bound = 1.0 / float(embed_size) ** 0.5
    params = []
    for _ in range(3):  # query, key, value
        key, kw, kb = jax.random.split(key, 3)
        w = jax.random.uniform(kw, (embed_size, embed_size), jnp.float32, -bound, bound)
        b = jax.random.uniform(kb, (1, embed_size), jnp.float32, -bound, bound)
        params.append((w, b))
    return params


def self_attention_reference(x, wq, bq, wk, bk, wv, bv, scale):
    q = x @ wq + bq
    k = x @ wk + bk
    v = x @ wv + bv
    scores = jnp.einsum('bqe,bke->bqk', q, k) / scale
    attn = jax.nn.softmax(scores, axis=-1)
    out = jnp.einsum('bqk,bke->bqe', attn, v)
    return out, attn


if __name__ == "__main__":
    batch, seq, embed_size = 2, 8, 32
    scale = embed_size ** 0.5

    key = jax.random.PRNGKey(0)
    key, kx = jax.random.split(key)
    x = jax.random.normal(kx, (batch, seq, embed_size), jnp.float32)

    (wq, bq), (wk, bk), (wv, bv) = init_params(key, embed_size)

    out, attn = self_attention_pallas(x, wq, bq, wk, bk, wv, bv, scale=scale)
    out, attn = jax.block_until_ready((out, attn))

    ref_out, ref_attn = self_attention_reference(x, wq, bq, wk, bk, wv, bv, scale)

    assert out.shape == (batch, seq, embed_size)
    assert attn.shape == (batch, seq, seq)
    assert jnp.allclose(attn, ref_attn, atol=1e-5, rtol=1e-5)
    assert jnp.allclose(out, ref_out, atol=1e-5, rtol=1e-5)
    # attention weights rows must sum to 1
    assert jnp.allclose(jnp.sum(attn, axis=-1), 1.0, atol=1e-5)

    print("KERNEL_OK")
</pallas_src>

<mosaic_0001>
module attributes {stable_mosaic.version = 11 : i64} {
  func.func @_self_attention_kernel(%arg0: i32, %arg1: memref<1x8x128xf32, #tpu.memory_space<vmem>>, %arg2: memref<128x128xf32, #tpu.memory_space<vmem>>, %arg3: memref<128x128xf32, #tpu.memory_space<vmem>>, %arg4: memref<128x128xf32, #tpu.memory_space<vmem>>, %arg5: memref<1x128xf32, #tpu.memory_space<vmem>>, %arg6: memref<1x128xf32, #tpu.memory_space<vmem>>, %arg7: memref<1x128xf32, #tpu.memory_space<vmem>>, %arg8: memref<1x8x128xf32, #tpu.memory_space<vmem>>, %arg9: memref<1x8x8xf32, #tpu.memory_space<vmem>>) attributes {dimension_semantics = [#tpu.dimension_semantics<parallel>], iteration_bounds = array<i64: 2>, scalar_prefetch = 0 : i64, scratch_operands = 0 : i64, tpu.core_type = #tpu.core_type<tc>, window_params = [{transform_indices = @transform_0, window_bounds = array<i64: 1, 8, 128>}, {pipeline_mode = #tpu.pipeline_mode<synchronous>, transform_indices = @transform_1, window_bounds = array<i64: 128, 128>}, {pipeline_mode = #tpu.pipeline_mode<synchronous>, transform_indices = @transform_2, window_bounds = array<i64: 128, 128>}, {pipeline_mode = #tpu.pipeline_mode<synchronous>, transform_indices = @transform_3, window_bounds = array<i64: 128, 128>}, {pipeline_mode = #tpu.pipeline_mode<synchronous>, transform_indices = @transform_4, window_bounds = array<i64: 1, 128>}, {pipeline_mode = #tpu.pipeline_mode<synchronous>, transform_indices = @transform_5, window_bounds = array<i64: 1, 128>}, {pipeline_mode = #tpu.pipeline_mode<synchronous>, transform_indices = @transform_6, window_bounds = array<i64: 1, 128>}, {transform_indices = @transform_7, window_bounds = array<i64: 1, 8, 128>}, {transform_indices = @transform_8, window_bounds = array<i64: 1, 8, 8>}]} {
    %c0 = arith.constant 0 : index
    %c0_0 = arith.constant 0 : index
    %c0_1 = arith.constant 0 : index
    %0 = vector.load %arg1[%c0, %c0_0, %c0_1] : memref<1x8x128xf32, #tpu.memory_space<vmem>>, vector<1x8x128xf32>
    %1 = vector.shape_cast %0 : vector<1x8x128xf32> to vector<8x128xf32>
    %c0_2 = arith.constant 0 : index
    %c0_3 = arith.constant 0 : index
    %2 = vector.load %arg2[%c0_2, %c0_3] : memref<128x128xf32, #tpu.memory_space<vmem>>, vector<128x128xf32>
    %cst = arith.constant dense<0.000000e+00> : vector<8x128xf32>
    %3 = tpu.matmul %1, %2, %cst {dimension_numbers = #tpu.dot_dimension_numbers<[1], [0], [0], [1], [0, 0, 1, 1], [], []>} : vector<8x128xf32>, vector<128x128xf32>, vector<8x128xf32> -> vector<8x128xf32>
    %c0_4 = arith.constant 0 : index
    %c0_5 = arith.constant 0 : index
    %4 = vector.load %arg5[%c0_4, %c0_5] : memref<1x128xf32, #tpu.memory_space<vmem>>, vector<1x128xf32>
    %5 = vector.broadcast %4 : vector<1x128xf32> to vector<8x128xf32>
    %6 = arith.addf %3, %5 : vector<8x128xf32>
    %c0_6 = arith.constant 0 : index
    %c0_7 = arith.constant 0 : index
    %7 = vector.load %arg3[%c0_6, %c0_7] : memref<128x128xf32, #tpu.memory_space<vmem>>, vector<128x128xf32>
    %cst_8 = arith.constant dense<0.000000e+00> : vector<8x128xf32>
    %8 = tpu.matmul %1, %7, %cst_8 {dimension_numbers = #tpu.dot_dimension_numbers<[1], [0], [0], [1], [0, 0, 1, 1], [], []>} : vector<8x128xf32>, vector<128x128xf32>, vector<8x128xf32> -> vector<8x128xf32>
    %c0_9 = arith.constant 0 : index
    %c0_10 = arith.constant 0 : index
    %9 = vector.load %arg6[%c0_9, %c0_10] : memref<1x128xf32, #tpu.memory_space<vmem>>, vector<1x128xf32>
    %10 = vector.broadcast %9 : vector<1x128xf32> to vector<8x128xf32>
    %11 = arith.addf %8, %10 : vector<8x128xf32>
    %c0_11 = arith.constant 0 : index
    %c0_12 = arith.constant 0 : index
    %12 = vector.load %arg4[%c0_11, %c0_12] : memref<128x128xf32, #tpu.memory_space<vmem>>, vector<128x128xf32>
    %cst_13 = arith.constant dense<0.000000e+00> : vector<8x128xf32>
    %13 = tpu.matmul %1, %12, %cst_13 {dimension_numbers = #tpu.dot_dimension_numbers<[1], [0], [0], [1], [0, 0, 1, 1], [], []>} : vector<8x128xf32>, vector<128x128xf32>, vector<8x128xf32> -> vector<8x128xf32>
    %c0_14 = arith.constant 0 : index
    %c0_15 = arith.constant 0 : index
    %14 = vector.load %arg7[%c0_14, %c0_15] : memref<1x128xf32, #tpu.memory_space<vmem>>, vector<1x128xf32>
    %15 = vector.broadcast %14 : vector<1x128xf32> to vector<8x128xf32>
    %16 = arith.addf %13, %15 : vector<8x128xf32>
    %17 = tpu.transpose %11, [1, 0] : vector<8x128xf32> -> vector<128x8xf32>
    %cst_16 = arith.constant dense<0.000000e+00> : vector<8x8xf32>
    %18 = tpu.matmul %6, %17, %cst_16 {dimension_numbers = #tpu.dot_dimension_numbers<[1], [0], [0], [1], [0, 0, 1, 1], [], []>} : vector<8x128xf32>, vector<128x8xf32>, vector<8x8xf32> -> vector<8x8xf32>
    %cst_17 = arith.constant 0.176776692 : f32
    %19 = vector.broadcast %cst_17 : f32 to vector<8x8xf32>
    %20 = arith.mulf %18, %19 : vector<8x8xf32>
    %cst_18 = arith.constant dense<0xFF800000> : vector<8xf32>
    %21 = vector.multi_reduction <maximumf>, %20, %cst_18 [1] : vector<8x8xf32> to vector<8xf32>
    %22 = vector.shape_cast %21 : vector<8xf32> to vector<8x1xf32>
    %23 = vector.broadcast %22 : vector<8x1xf32> to vector<8x8xf32>
    %24 = arith.subf %20, %23 : vector<8x8xf32>
    %25 = math.exp %24 : vector<8x8xf32>
    %cst_19 = arith.constant dense<0.000000e+00> : vector<8xf32>
    %26 = vector.multi_reduction <add>, %25, %cst_19 [1] : vector<8x8xf32> to vector<8xf32>
    %27 = vector.shape_cast %26 : vector<8xf32> to vector<8x1xf32>
    %28 = vector.broadcast %27 : vector<8x1xf32> to vector<8x8xf32>
    %29 = arith.divf %25, %28 : vector<8x8xf32>
    %cst_20 = arith.constant dense<0.000000e+00> : vector<8x128xf32>
    %30 = tpu.matmul %29, %16, %cst_20 {dimension_numbers = #tpu.dot_dimension_numbers<[1], [0], [0], [1], [0, 0, 1, 1], [], []>} : vector<8x8xf32>, vector<8x128xf32>, vector<8x128xf32> -> vector<8x128xf32>
    %c0_21 = arith.constant 0 : index
    %c0_22 = arith.constant 0 : index
    %c0_23 = arith.constant 0 : index
    %31 = vector.load %arg8[%c0_21, %c0_22, %c0_23] : memref<1x8x128xf32, #tpu.memory_space<vmem>>, vector<1x8x128xf32>
    %32 = vector.shape_cast %31 : vector<1x8x128xf32> to vector<8x128xf32>
    %33 = vector.shape_cast %30 : vector<8x128xf32> to vector<1x8x128xf32>
    tpu.vector_store %arg8[%c0_21, %c0_22, %c0_23], %33 {strides = array<i32>} : memref<1x8x128xf32, #tpu.memory_space<vmem>>, vector<1x8x128xf32>,
    %c0_24 = arith.constant 0 : index
    %c0_25 = arith.constant 0 : index
    %c0_26 = arith.constant 0 : index
    %34 = vector.load %arg9[%c0_24, %c0_25, %c0_26] : memref<1x8x8xf32, #tpu.memory_space<vmem>>, vector<1x8x8xf32>
    %35 = vector.shape_cast %34 : vector<1x8x8xf32> to vector<8x8xf32>
    %36 = vector.shape_cast %29 : vector<8x8xf32> to vector<1x8x8xf32>
    tpu.vector_store %arg9[%c0_24, %c0_25, %c0_26], %36 {strides = array<i32>} : memref<1x8x8xf32, #tpu.memory_space<vmem>>, vector<1x8x8xf32>,
    return
  }
  func.func @transform_0(%arg0: i32) -> (i32, i32, i32) {
    %c0_i32 = arith.constant 0 : i32
    %c0_i32_0 = arith.constant 0 : i32
    %c0_i32_1 = arith.constant 0 : i32
    return %arg0, %c0_i32, %c0_i32_0 : i32, i32, i32
  }
  func.func @transform_1(%arg0: i32) -> (i32, i32) {
    %c0_i32 = arith.constant 0 : i32
    %c0_i32_0 = arith.constant 0 : i32
    %c0_i32_1 = arith.constant 0 : i32
    return %c0_i32, %c0_i32_0 : i32, i32
  }
  func.func @transform_2(%arg0: i32) -> (i32, i32) {
    %c0_i32 = arith.constant 0 : i32
    %c0_i32_0 = arith.constant 0 : i32
    %c0_i32_1 = arith.constant 0 : i32
    return %c0_i32, %c0_i32_0 : i32, i32
  }
  func.func @transform_3(%arg0: i32) -> (i32, i32) {
    %c0_i32 = arith.constant 0 : i32
    %c0_i32_0 = arith.constant 0 : i32
    %c0_i32_1 = arith.constant 0 : i32
    return %c0_i32, %c0_i32_0 : i32, i32
  }
  func.func @transform_4(%arg0: i32) -> (i32, i32) {
    %c0_i32 = arith.constant 0 : i32
    %c0_i32_0 = arith.constant 0 : i32
    %c0_i32_1 = arith.constant 0 : i32
    return %c0_i32, %c0_i32_0 : i32, i32
  }
  func.func @transform_5(%arg0: i32) -> (i32, i32) {
    %c0_i32 = arith.constant 0 : i32
    %c0_i32_0 = arith.constant 0 : i32
    %c0_i32_1 = arith.constant 0 : i32
    return %c0_i32, %c0_i32_0 : i32, i32
  }
  func.func @transform_6(%arg0: i32) -> (i32, i32) {
    %c0_i32 = arith.constant 0 : i32
    %c0_i32_0 = arith.constant 0 : i32
    %c0_i32_1 = arith.constant 0 : i32
    return %c0_i32, %c0_i32_0 : i32, i32
  }
  func.func @transform_7(%arg0: i32) -> (i32, i32, i32) {
    %c0_i32 = arith.constant 0 : i32
    %c0_i32_0 = arith.constant 0 : i32
    %c0_i32_1 = arith.constant 0 : i32
    return %arg0, %c0_i32, %c0_i32_0 : i32, i32, i32
  }
  func.func @transform_8(%arg0: i32) -> (i32, i32, i32) {
    %c0_i32 = arith.constant 0 : i32
    %c0_i32_0 = arith.constant 0 : i32
    %c0_i32_1 = arith.constant 0 : i32
    return %arg0, %c0_i32, %c0_i32_0 : i32, i32, i32
  }
}

</mosaic_0001>

<llo_original>
// kernel: tpu_custom_call.1
$region0: #{tpu_custom_call.1}
  #allocation0 [shape = 'u32[]', space=smem, size = 0x4, offset = 0x4, fixed_abs, tag = 'smem constant byte address 0x4 - core index']
  #allocation1 [shape = 'u32[144,128]{1,0:T(1,128)}', space=vmem, size = 0x12000, scoped, tag = 'internal scratch']
  %s0 = inlined_call_operand.hbm [shape: f32[2,8,128], index: 0, kind: input, shape index: {}]
  %s1 = inlined_call_operand.hbm [shape: f32[128,128], index: 1, kind: input, shape index: {}]
  %s2 = inlined_call_operand.hbm [shape: f32[128,128], index: 2, kind: input, shape index: {}]
  %s3 = inlined_call_operand.hbm [shape: f32[128,128], index: 3, kind: input, shape index: {}]
  %s4 = inlined_call_operand.vmem [shape: f32[1,128], index: 4, kind: input, shape index: {}]
  %s5 = inlined_call_operand.vmem [shape: f32[1,128], index: 5, kind: input, shape index: {}]
  %s6 = inlined_call_operand.vmem [shape: f32[1,128], index: 6, kind: input, shape index: {}]
  %s7 = inlined_call_operand.hbm [shape: f32[2,8,128], index: 7, kind: output, shape index: {0}]
  %s8 = inlined_call_operand.hbm [shape: f32[2,8,8], index: 8, kind: output, shape index: {1}]
  %9 = xla_tuple %s7, %s8
  %s10 = sld [smem:[#allocation0]]
  $region85: #{tpu_custom_call.1} parent=0
    _
  %s12 = ssub.s32 1, %s10
  %s13 = scalar_select 0, %s12, %s10
  $region1: #{tpu_custom_call.1} parent=0
    #allocation2 [shape = 'u8[8192]{0}', space=vmem, size = 0x2000, scoped, tag = 'input window, operand 0']
    #allocation3 [shape = 's32[2]{0}', space=sflag, size = 0x8, scoped, tag = 'scoped memory for tpu_custom_call.1']
    #allocation4 [shape = 's32[2]{0}', space=sflag, size = 0x8, scoped, tag = 'scoped memory for tpu_custom_call.1']
    #allocation5 [shape = 'u8[65536]{0}', space=vmem, size = 0x10000, scoped, tag = 'input window, operand 1, single buffered']
    #allocation6 [shape = 's32[1]{0}', space=sflag, size = 0x4, scoped, tag = 'scoped memory for tpu_custom_call.1']
    #allocation7 [shape = 'u8[65536]{0}', space=vmem, size = 0x10000, scoped, tag = 'input window, operand 2, single buffered']
    #allocation8 [shape = 'u8[65536]{0}', space=vmem, size = 0x10000, scoped, tag = 'input window, operand 3, single buffered']
    #allocation9 [shape = 's32[1]{0}', space=sflag, size = 0x4, scoped, tag = 'scoped memory for tpu_custom_call.1']
    #allocation10 [shape = 'u8[8192]{0}', space=vmem, size = 0x2000, scoped, tag = 'output window, operand 0']
    #allocation11 [shape = 'u8[8192]{0}', space=vmem, size = 0x2000, scoped, tag = 'output window, operand 1']
    #allocation12 [shape = 's32[2]{0}', space=sflag, size = 0x8, scoped, tag = 'scoped memory for tpu_custom_call.1']
    %14 = vsyncpa [#allocation3], 0
    %s15 = scalar_lea.sflag [#allocation3], 1
    %16 = vsyncpa %s15, 0
    %17 = vsyncpa [#allocation6], 0
    %18 = vsyncpa [#allocation9], 0
    %19 = vsyncpa [#allocation4], 0
    %s20 = scalar_lea.sflag [#allocation4], 1
    %21 = vsyncpa %s20, 0
    %22 = vsyncpa [#allocation12], 0
    %s23 = scalar_lea.sflag [#allocation12], 1
    %24 = vsyncpa %s23, 0
    loop: start=0, step=1, limit=4
    $region2: #{tpu_custom_call.1} parent=1 // loop_pre_header
      _
    $region3: #{tpu_custom_call.1} parent=1 // loop_header
      %s26 = sphi 0, %s30
      %p27 = scmp.ge.s32.totalorder %s26, 4
      %s36 = sphi 0, %s38
      %s39 = sphi 0, %s36
      %s40 = sphi 0, %s39
      %s56 = sphi 0, %s40
      %s60 = sphi 0, %s60
      %s62 = sphi 0, %s60
      %s63 = sphi 0, %s62
      %s77 = sphi 0, %s63
      %s81 = sphi 0, %s81
      %s83 = sphi 0, %s81
      %s84 = sphi 0, %s83
      %s98 = sphi 0, %s84
      %s102 = sphi 0, %s102
      %s104 = sphi 0, %s102
      %s105 = sphi 0, %s104
      %s119 = sphi 0, %s105
      %s123 = sphi 0, %s123
      %s125 = sphi 0, %s123
      %s126 = sphi 0, %s125
      %s140 = sphi 0, %s126
      %s144 = sphi 0, %s144
      %s146 = sphi 0, %s144
      %s147 = sphi 0, %s146
      %s161 = sphi 0, %s147
      %s165 = sphi 0, %s165
      %s167 = sphi 0, %s165
      %s168 = sphi 0, %s167
      %s182 = sphi 0, %s168
      %s188 = sphi 0, %s190
      %s191 = sphi 0, %s188
      %s192 = sphi 0, %s191
      %s208 = sphi 0, %s192
      %s214 = sphi 0, %s216
      %s217 = sphi 0, %s214
      %s218 = sphi 0, %s217
      %s234 = sphi 0, %s218
    $region4: #{tpu_custom_call.1} parent=1 // loop_header_branch
      %29 = sbr.rel (%p27) target = $region8
    $region5: #{tpu_custom_call.1} parent=1 // loop_body
      %s31 = ssub.s32 %s26, 1
      %s32 = ssub.s32 %s26, 2
      %s33 = sadd.s32 %s26, 1
      %s34 = ssub.s32 %s26, %s33
      %p35 = scmp.eq.s32.totalorder %s34, 0
      %s37 = sadd.s32 %s36, 1
      %s38 = scalar_select %p35, %s36, %s37
      %p41 = pneg %p35
      %p42 = scmp.eq.s32.totalorder %s26, 1
      %p43 = por %p41, %p42
      %p44 = scmp.ne.s32.totalorder %s36, %s39
      %p45 = scmp.eq.s32.totalorder %s26, 0
      %p46 = por %p44, %p45
      %p47 = scmp.ne.s32.totalorder %s36, %s39
      %p48 = scmp.eq.s32.totalorder %s31, 1
      %p49 = por %p47, %p48
      %p50 = scmp.ne.s32.totalorder %s39, %s40
      %p51 = scmp.eq.s32.totalorder %s31, 0
      %p52 = por %p50, %p51
      %p53 = scmp.ne.s32.totalorder %s39, %s40
      %p54 = scmp.eq.s32.totalorder %s32, 1
      %p55 = por %p53, %p54
      %p57 = scmp.ne.s32.totalorder %s40, %s56
      %p58 = scmp.eq.s32.totalorder %s32, 0
      %p59 = por %p57, %p58
      %s61 = sadd.s32 %s60, 1
      %p64 = scmp.eq.s32.totalorder %s26, 1
      %p65 = scmp.ne.s32.totalorder %s60, %s62
      %p66 = scmp.eq.s32.totalorder %s26, 0
      %p67 = por %p65, %p66
      %p68 = scmp.ne.s32.totalorder %s60, %s62
      %p69 = scmp.eq.s32.totalorder %s31, 1
      %p70 = por %p68, %p69
      %p71 = scmp.ne.s32.totalorder %s62, %s63
      %p72 = scmp.eq.s32.totalorder %s31, 0
      %p73 = por %p71, %p72
      %p74 = scmp.ne.s32.totalorder %s62, %s63
      %p75 = scmp.eq.s32.totalorder %s32, 1
      %p76 = por %p74, %p75
      %p78 = scmp.ne.s32.totalorder %s63, %s77
      %p79 = scmp.eq.s32.totalorder %s32, 0
      %p80 = por %p78, %p79
      %s82 = sadd.s32 %s81, 1
      %p85 = scmp.eq.s32.totalorder %s26, 1
      %p86 = scmp.ne.s32.totalorder %s81, %s83
      %p87 = scmp.eq.s32.totalorder %s26, 0
      %p88 = por %p86, %p87
      %p89 = scmp.ne.s32.totalorder %s81, %s83
      %p90 = scmp.eq.s32.totalorder %s31, 1
      %p91 = por %p89, %p90
      %p92 = scmp.ne.s32.totalorder %s83, %s84
      %p93 = scmp.eq.s32.totalorder %s31, 0
      %p94 = por %p92, %p93
      %p95 = scmp.ne.s32.totalorder %s83, %s84
      %p96 = scmp.eq.s32.totalorder %s32, 1
      %p97 = por %p95, %p96
      %p99 = scmp.ne.s32.totalorder %s84, %s98
      %p100 = scmp.eq.s32.totalorder %s32, 0
      %p101 = por %p99, %p100
      %s103 = sadd.s32 %s102, 1
      %p106 = scmp.eq.s32.totalorder %s26, 1
      %p107 = scmp.ne.s32.totalorder %s102, %s104
      %p108 = scmp.eq.s32.totalorder %s26, 0
      %p109 = por %p107, %p108
      %p110 = scmp.ne.s32.totalorder %s102, %s104
      %p111 = scmp.eq.s32.totalorder %s31, 1
      %p112 = por %p110, %p111
      %p113 = scmp.ne.s32.totalorder %s104, %s105
      %p114 = scmp.eq.s32.totalorder %s31, 0
      %p115 = por %p113, %p114
      %p116 = scmp.ne.s32.totalorder %s104, %s105
      %p117 = scmp.eq.s32.totalorder %s32, 1
      %p118 = por %p116, %p117
      %p120 = scmp.ne.s32.totalorder %s105, %s119
      %p121 = scmp.eq.s32.totalorder %s32, 0
      %p122 = por %p120, %p121
      %s124 = sadd.s32 %s123, 1
      %p127 = scmp.eq.s32.totalorder %s26, 1
      %p128 = scmp.ne.s32.totalorder %s123, %s125
      %p129 = scmp.eq.s32.totalorder %s26, 0
      %p130 = por %p128, %p129
      %p131 = scmp.ne.s32.totalorder %s123, %s125
      %p132 = scmp.eq.s32.totalorder %s31, 1
      %p133 = por %p131, %p132
      %p134 = scmp.ne.s32.totalorder %s125, %s126
      %p135 = scmp.eq.s32.totalorder %s31, 0
      %p136 = por %p134, %p135
      %p137 = scmp.ne.s32.totalorder %s125, %s126
      %p138 = scmp.eq.s32.totalorder %s32, 1
      %p139 = por %p137, %p138
      %p141 = scmp.ne.s32.totalorder %s126, %s140
      %p142 = scmp.eq.s32.totalorder %s32, 0
      %p143 = por %p141, %p142
      %s145 = sadd.s32 %s144, 1
      %p148 = scmp.eq.s32.totalorder %s26, 1
      %p149 = scmp.ne.s32.totalorder %s144, %s146
      %p150 = scmp.eq.s32.totalorder %s26, 0
      %p151 = por %p149, %p150
      %p152 = scmp.ne.s32.totalorder %s144, %s146
      %p153 = scmp.eq.s32.totalorder %s31, 1
      %p154 = por %p152, %p153
      %p155 = scmp.ne.s32.totalorder %s146, %s147
      %p156 = scmp.eq.s32.totalorder %s31, 0
      %p157 = por %p155, %p156
      %p158 = scmp.ne.s32.totalorder %s146, %s147
      %p159 = scmp.eq.s32.totalorder %s32, 1
      %p160 = por %p158, %p159
      %p162 = scmp.ne.s32.totalorder %s147, %s161
      %p163 = scmp.eq.s32.totalorder %s32, 0
      %p164 = por %p162, %p163
      %s166 = sadd.s32 %s165, 1
      %p169 = scmp.eq.s32.totalorder %s26, 1
      %p170 = scmp.ne.s32.totalorder %s165, %s167
      %p171 = scmp.eq.s32.totalorder %s26, 0
      %p172 = por %p170, %p171
      %p173 = scmp.ne.s32.totalorder %s165, %s167
      %p174 = scmp.eq.s32.totalorder %s31, 1
      %p175 = por %p173, %p174
      %p176 = scmp.ne.s32.totalorder %s167, %s168
      %p177 = scmp.eq.s32.totalorder %s31, 0
      %p178 = por %p176, %p177
      %p179 = scmp.ne.s32.totalorder %s167, %s168
      %p180 = scmp.eq.s32.totalorder %s32, 1
      %p181 = por %p179, %p180
      %p183 = scmp.ne.s32.totalorder %s168, %s182
      %p184 = scmp.eq.s32.totalorder %s32, 0
      %p185 = por %p183, %p184
      %s186 = ssub.s32 %s26, %s33
      %p187 = scmp.eq.s32.totalorder %s186, 0
      %s189 = sadd.s32 %s188, 1
      %s190 = scalar_select %p187, %s188, %s189
      %p193 = pneg %p187
      %p194 = scmp.eq.s32.totalorder %s26, 1
      %p195 = por %p193, %p194
      %p196 = scmp.ne.s32.totalorder %s188, %s191
      %p197 = scmp.eq.s32.totalorder %s26, 0
      %p198 = por %p196, %p197
      %p199 = scmp.ne.s32.totalorder %s188, %s191
      %p200 = scmp.eq.s32.totalorder %s31, 1
      %p201 = por %p199, %p200
      %p202 = scmp.ne.s32.totalorder %s191, %s192
      %p203 = scmp.eq.s32.totalorder %s31, 0
      %p204 = por %p202, %p203
      %p205 = scmp.ne.s32.totalorder %s191, %s192
      %p206 = scmp.eq.s32.totalorder %s32, 1
      %p207 = por %p205, %p206
      %p209 = scmp.ne.s32.totalorder %s192, %s208
      %p210 = scmp.eq.s32.totalorder %s32, 0
      %p211 = por %p209, %p210
      %s212 = ssub.s32 %s26, %s33
      %p213 = scmp.eq.s32.totalorder %s212, 0
      %s215 = sadd.s32 %s214, 1
      %s216 = scalar_select %p213, %s214, %s215
      %p219 = pneg %p213
      %p220 = scmp.eq.s32.totalorder %s26, 1
      %p221 = por %p219, %p220
      %p222 = scmp.ne.s32.totalorder %s214, %s217
      %p223 = scmp.eq.s32.totalorder %s26, 0
      %p224 = por %p222, %p223
      %p225 = scmp.ne.s32.totalorder %s214, %s217
      %p226 = scmp.eq.s32.totalorder %s31, 1
      %p227 = por %p225, %p226
      %p228 = scmp.ne.s32.totalorder %s217, %s218
      %p229 = scmp.eq.s32.totalorder %s31, 0
      %p230 = por %p228, %p229
      %p231 = scmp.ne.s32.totalorder %s217, %s218
      %p232 = scmp.eq.s32.totalorder %s32, 1
      %p233 = por %p231, %p232
      %p235 = scmp.ne.s32.totalorder %s218, %s234
      %p236 = scmp.eq.s32.totalorder %s32, 0
      %p237 = por %p235, %p236
      %p238 = scmp.le.s32.totalorder 1, %s26
      %p239 = scmp.lt.s32.totalorder %s26, 3
      %p240 = pnand %p238, %p239
      %p241 = pneg %p240
      // Predicated region
      $region9: #{tpu_custom_call.1} parent=5 // pred_check
        _
      $region10: #{tpu_custom_call.1} parent=5 // pred_check_branch
        %243 = sbr.rel (%p240) target = $region12
      $region11: #{tpu_custom_call.1} parent=5 // pred_region
        %s244 = ssub.s32 %s26, 1
        // Predicated region
        $region13: #{tpu_custom_call.1} parent=11 // pred_check
          %p245 = pneg %p73
        $region14: #{tpu_custom_call.1} parent=11 // pred_check_branch
          %247 = sbr.rel (%p245) target = $region16
        $region15: #{tpu_custom_call.1} parent=11 // pred_region
          %s249 = ssub.s32 2048, 2048
          %250 = vsyncadd [#allocation6], %s249
          %s251 = sshll.u32 [#allocation5], 4
          %s252 = int_to_ptr.vmem [resolvable:$true] %s251
          %257 = dma.hbm_to_vmem [thread:$0]  %s1, 2048, %s252, [#allocation6], 128, 128, 8
        $region16: #{tpu_custom_call.1} parent=11 // pred_fallthru
          _
        // Predicated region
        $region17: #{tpu_custom_call.1} parent=11 // pred_check
          %p258 = pneg %p94
        $region18: #{tpu_custom_call.1} parent=11 // pred_check_branch
          %260 = sbr.rel (%p258) target = $region20
        $region19: #{tpu_custom_call.1} parent=11 // pred_region
          %s262 = ssub.s32 2048, 2048
          %263 = vsyncadd [#allocation6], %s262
          %s264 = sshll.u32 [#allocation7], 4
          %s265 = int_to_ptr.vmem [resolvable:$true] %s264
          %270 = dma.hbm_to_vmem [thread:$0]  %s2, 2048, %s265, [#allocation6], 128, 128, 8
        $region20: #{tpu_custom_call.1} parent=11 // pred_fallthru
          _
        // Predicated region
        $region21: #{tpu_custom_call.1} parent=11 // pred_check
          %p271 = pneg %p115
        $region22: #{tpu_custom_call.1} parent=11 // pred_check_branch
          %273 = sbr.rel (%p271) target = $region24
        $region23: #{tpu_custom_call.1} parent=11 // pred_region
          %s275 = ssub.s32 2048, 2048
          %276 = vsyncadd [#allocation9], %s275
          %s277 = sshll.u32 [#allocation8], 4
          %s278 = int_to_ptr.vmem [resolvable:$true] %s277
          %283 = dma.hbm_to_vmem [thread:$0]  %s3, 2048, %s278, [#allocation9], 128, 128, 8
        $region24: #{tpu_custom_call.1} parent=11 // pred_fallthru
          _
        // Predicated region
        $region25: #{tpu_custom_call.1} parent=11 // pred_check
          %p284 = pneg %p136
        $region26: #{tpu_custom_call.1} parent=11 // pred_check_branch
          %286 = sbr.rel (%p284) target = $region28
        $region27: #{tpu_custom_call.1} parent=11 // pred_region
          _
        $region28: #{tpu_custom_call.1} parent=11 // pred_fallthru
          _
        // Predicated region
        $region29: #{tpu_custom_call.1} parent=11 // pred_check
          %p287 = pneg %p157
        $region30: #{tpu_custom_call.1} parent=11 // pred_check_branch
          %289 = sbr.rel (%p287) target = $region32
        $region31: #{tpu_custom_call.1} parent=11 // pred_region
          _
        $region32: #{tpu_custom_call.1} parent=11 // pred_fallthru
          _
        // Predicated region
        $region33: #{tpu_custom_call.1} parent=11 // pred_check
          %p290 = pneg %p178
        $region34: #{tpu_custom_call.1} parent=11 // pred_check_branch
          %292 = sbr.rel (%p290) target = $region36
        $region35: #{tpu_custom_call.1} parent=11 // pred_region
          _
        $region36: #{tpu_custom_call.1} parent=11 // pred_fallthru
          _
      $region12: #{tpu_custom_call.1} parent=5 // pred_fallthru
        _
      %p293 = scmp.lt.s32.totalorder %s26, 2
      // Predicated region
      $region37: #{tpu_custom_call.1} parent=5 // pred_check
        %p294 = pneg %p293
      $region38: #{tpu_custom_call.1} parent=5 // pred_check_branch
        %296 = sbr.rel (%p294) target = $region40
      $region39: #{tpu_custom_call.1} parent=5 // pred_region
        // Predicated region
        $region41: #{tpu_custom_call.1} parent=39 // pred_check
          %p297 = pneg %p46
        $region42: #{tpu_custom_call.1} parent=39 // pred_check_branch
          %299 = sbr.rel (%p297) target = $region44
        $region43: #{tpu_custom_call.1} parent=39 // pred_region
          %s300 = sand.u32 %s36, 1
          %s301 = scalar_lea.sflag [#allocation3], %s300
          %s302 = sand.u32 %s36, 1
          %s303 = smul.addr %s302, 8
          %s304 = scalar_lea.vmem [#allocation2], %s303
          %s306 = ssub.s32 128, 128
          %307 = vsyncadd %s301, %s306
          %s308 = smul.addr %s26, 128
          %s309 = scalar_lea.hbm %s0, %s308
          %s311 = sshll.u32 %s304, 4
          %s312 = int_to_ptr.vmem [resolvable:$true] %s311
          %314 = dma.hbm_to_vmem [thread:$0]  %s309, 128, %s312, %s301
        $region44: #{tpu_custom_call.1} parent=39 // pred_fallthru
          _
      $region40: #{tpu_custom_call.1} parent=5 // pred_fallthru
        _
      %p315 = scmp.le.s32.totalorder 1, %s26
      %p316 = scmp.lt.s32.totalorder %s26, 3
      %p317 = pnand %p315, %p316
      %p318 = pneg %p317
      // Predicated region
      $region45: #{tpu_custom_call.1} parent=5 // pred_check
        _
      $region46: #{tpu_custom_call.1} parent=5 // pred_check_branch
        %320 = sbr.rel (%p317) target = $region48
      $region47: #{tpu_custom_call.1} parent=5 // pred_region
        %s321 = ssub.s32 %s26, 1
        %s322 = sand.u32 %s39, 1
        %s323 = scalar_lea.sflag [#allocation3], %s322
        %s324 = sand.u32 %s39, 1
        %s325 = smul.addr %s324, 8
        %s326 = scalar_lea.vmem [#allocation2], %s325
        // Predicated region
        $region49: #{tpu_custom_call.1} parent=47 // pred_check
          %p327 = pneg %p52
        $region50: #{tpu_custom_call.1} parent=47 // pred_check_branch
          %329 = sbr.rel (%p327) target = $region52
        $region51: #{tpu_custom_call.1} parent=47 // pred_region
          %330 = dma.done %s323, 128
        $region52: #{tpu_custom_call.1} parent=47 // pred_fallthru
          _
        // Predicated region
        $region53: #{tpu_custom_call.1} parent=47 // pred_check
          %p331 = pneg %p73
        $region54: #{tpu_custom_call.1} parent=47 // pred_check_branch
          %333 = sbr.rel (%p331) target = $region56
        $region55: #{tpu_custom_call.1} parent=47 // pred_region
          %334 = dma.done [#allocation6], 2048
        $region56: #{tpu_custom_call.1} parent=47 // pred_fallthru
          _
        // Predicated region
        $region57: #{tpu_custom_call.1} parent=47 // pred_check
          %p335 = pneg %p94
        $region58: #{tpu_custom_call.1} parent=47 // pred_check_branch
          %337 = sbr.rel (%p335) target = $region60
        $region59: #{tpu_custom_call.1} parent=47 // pred_region
          %338 = dma.done [#allocation6], 2048
        $region60: #{tpu_custom_call.1} parent=47 // pred_fallthru
          _
        // Predicated region
        $region61: #{tpu_custom_call.1} parent=47 // pred_check
          %p339 = pneg %p115
        $region62: #{tpu_custom_call.1} parent=47 // pred_check_branch
          %341 = sbr.rel (%p339) target = $region64
        $region63: #{tpu_custom_call.1} parent=47 // pred_region
          %342 = dma.done [#allocation9], 2048
        $region64: #{tpu_custom_call.1} parent=47 // pred_fallthru
          _
        %s343 = sand.u32 %s39, 1
        %s344 = scalar_lea.sflag [#allocation3], %s343
        %s345 = sand.u32 %s39, 1
        %s346 = smul.addr %s345, 8
        %s347 = scalar_lea.vmem [#allocation2], %s346
        %p348 = pneg %p52
        %p349 = pneg %p49
        %p350 = pneg %p73
        %p351 = pneg %p70
        %p352 = pneg %p94
        %p353 = pneg %p91
        %p354 = pneg %p115
        %p355 = pneg %p112
        %p356 = pneg %p136
        %p357 = pneg %p133
        %p358 = pneg %p157
        %p359 = pneg %p154
        %p360 = pneg %p178
        %p361 = pneg %p175
        %p362 = pneg %p204
        %p363 = pneg %p201
        %s364 = sand.u32 %s191, 1
        %s365 = scalar_lea.sflag [#allocation4], %s364
        %s366 = sand.u32 %s191, 1
        %s367 = smul.addr %s366, 8
        %s368 = scalar_lea.vmem [#allocation10], %s367
        %p369 = pneg %p230
        %p370 = pneg %p227
        %s371 = sand.u32 %s217, 1
        %s372 = scalar_lea.sflag [#allocation12], %s371
        %s373 = sand.u32 %s217, 1
        %s374 = smul.addr %s373, 8
        %s375 = scalar_lea.vmem [#allocation11], %s374
        %v376 = vld [vmem:[%s326] sm:$0xff]
        %v377 = vld [vmem:[#allocation5] sm:$0xff]
        %v378 = vld [vmem:[#allocation5 + $0x8] sm:$0xff]
        %v379 = vld [vmem:[#allocation5 + $0x10] sm:$0xff]
        %v380 = vld [vmem:[#allocation5 + $0x18] sm:$0xff]
        %v381 = vld [vmem:[#allocation5 + $0x20] sm:$0xff]
        %v382 = vld [vmem:[#allocation5 + $0x28] sm:$0xff]
        %v383 = vld [vmem:[#allocation5 + $0x30] sm:$0xff]
        %v384 = vld [vmem:[#allocation5 + $0x38] sm:$0xff]
        %v385 = vld [vmem:[#allocation5 + $0x40] sm:$0xff]
        %v386 = vld [vmem:[#allocation5 + $0x48] sm:$0xff]
        %v387 = vld [vmem:[#allocation5 + $0x50] sm:$0xff]
        %v388 = vld [vmem:[#allocation5 + $0x58] sm:$0xff]
        %v389 = vld [vmem:[#allocation5 + $0x60] sm:$0xff]
        %v390 = vld [vmem:[#allocation5 + $0x68] sm:$0xff]
        %v391 = vld [vmem:[#allocation5 + $0x70] sm:$0xff]
        %v392 = vld [vmem:[#allocation5 + $0x78] sm:$0xff]
        %v393 = vld [vmem:[%s4] sm:$0x1]
        %v395 = vlaneseq
        %v396 = vshrl.u32 %v395, 7
        %v397 = vsub.s32 0, %v396
        %v398 = vrot.slane %v393, %v397
        %400 = vmatprep.subr.mxu0 0.0
        %401 = vmatpush1.msra.mxu0 %v392
        %402 = vmatprep.subr.mxu0 0.0
        %403 = vmatpush1.msra.mxu0 %v391
        %404 = vmatprep.subr.mxu0 0.0
        %405 = vmatpush1.msra.mxu0 %v390
        %406 = vmatprep.subr.mxu0 0.0
        %407 = vmatpush1.msra.mxu0 %v389
        %408 = vmatprep.subr.mxu0 0.0
        %409 = vmatpush1.msra.mxu0 %v388
        %410 = vmatprep.subr.mxu0 0.0
        %411 = vmatpush1.msra.mxu0 %v387
        %412 = vmatprep.subr.mxu0 0.0
        %413 = vmatpush1.msra.mxu0 %v386
        %414 = vmatprep.subr.mxu0 0.0
        %415 = vmatpush1.msra.mxu0 %v385
        %416 = vmatprep.subr.mxu0 0.0
        %417 = vmatpush1.msra.mxu0 %v384
        %418 = vmatprep.subr.mxu0 0.0
        %419 = vmatpush1.msra.mxu0 %v383
        %420 = vmatprep.subr.mxu0 0.0
        %421 = vmatpush1.msra.mxu0 %v382
        %422 = vmatprep.subr.mxu0 0.0
        %423 = vmatpush1.msra.mxu0 %v381
        %424 = vmatprep.subr.mxu0 0.0
        %425 = vmatpush1.msra.mxu0 %v380
        %426 = vmatprep.subr.mxu0 0.0
        %427 = vmatpush1.msra.mxu0 %v379
        %428 = vmatprep.subr.mxu0 0.0
        %429 = vmatpush1.msra.mxu0 %v378
        %430 = vmatprep.subr.mxu0 0.0
        %431 = vmatpush1.msra.mxu0 %v377
        %432 = vmatprep.subr.mxu0 0.0
        %433 = vmatpush2.msra.mxu0 0.0
        %434 = vmatprep.subr.mxu0 0.0
        %435 = vmatpush2.msra.mxu0 0.0
        %436 = vmatprep.subr.mxu0 0.0
        %437 = vmatpush2.msra.mxu0 0.0
        %438 = vmatprep.subr.mxu0 0.0
        %439 = vmatpush2.msra.mxu0 0.0
        %440 = vmatprep.subr.mxu0 0.0
        %441 = vmatpush2.msra.mxu0 0.0
        %442 = vmatprep.subr.mxu0 0.0
        %443 = vmatpush2.msra.mxu0 0.0
        %444 = vmatprep.subr.mxu0 0.0
        %445 = vmatpush2.msra.mxu0 0.0
        %446 = vmatprep.subr.mxu0 0.0
        %447 = vmatpush2.msra.mxu0 0.0
        %448 = vmatprep.subr.mxu0 0.0
        %449 = vmatpush2.msra.mxu0 0.0
        %450 = vmatprep.subr.mxu0 0.0
        %451 = vmatpush2.msra.mxu0 0.0
        %452 = vmatprep.subr.mxu0 0.0
        %453 = vmatpush2.msra.mxu0 0.0
        %454 = vmatprep.subr.mxu0 0.0
        %455 = vmatpush2.msra.mxu0 0.0
        %456 = vmatprep.subr.mxu0 0.0
        %457 = vmatpush2.msra.mxu0 0.0
        %458 = vmatprep.subr.mxu0 0.0
        %459 = vmatpush2.msra.mxu0 0.0
        %460 = vmatprep.subr.mxu0 0.0
        %461 = vmatpush2.msra.mxu0 0.0
        %462 = vmatprep.subr.mxu0 0.0
        %463 = vmatpush2.msra.mxu0 0.0
        %464 = vmatprep.mubr.f32.mxu0 0.0
        %465 = vmatmul.mubr.f32.gmra.mxu0 %v376
        %v466 = vpop.f32.mrf.mxu0
        %v467 = vadd.f32 %v398, %v466
        %v468 = vpop.f32.mrf.mxu0
        %469 = vdwg.mxu0
        %v470 = vld [vmem:[#allocation7] sm:$0xff]
        %v471 = vld [vmem:[#allocation7 + $0x8] sm:$0xff]
        %v472 = vld [vmem:[#allocation7 + $0x10] sm:$0xff]
        %v473 = vld [vmem:[#allocation7 + $0x18] sm:$0xff]
        %v474 = vld [vmem:[#allocation7 + $0x20] sm:$0xff]
        %v475 = vld [vmem:[#allocation7 + $0x28] sm:$0xff]
        %v476 = vld [vmem:[#allocation7 + $0x30] sm:$0xff]
        %v477 = vld [vmem:[#allocation7 + $0x38] sm:$0xff]
        %v478 = vld [vmem:[#allocation7 + $0x40] sm:$0xff]
        %v479 = vld [vmem:[#allocation7 + $0x48] sm:$0xff]
        %v480 = vld [vmem:[#allocation7 + $0x50] sm:$0xff]
        %v481 = vld [vmem:[#allocation7 + $0x58] sm:$0xff]
        %v482 = vld [vmem:[#allocation7 + $0x60] sm:$0xff]
        %v483 = vld [vmem:[#allocation7 + $0x68] sm:$0xff]
        %v484 = vld [vmem:[#allocation7 + $0x70] sm:$0xff]
        %v485 = vld [vmem:[#allocation7 + $0x78] sm:$0xff]
        %v486 = vld [vmem:[%s5] sm:$0x1]
        %v488 = vlaneseq
        %v489 = vshrl.u32 %v488, 7
        %v490 = vsub.s32 0, %v489
        %v491 = vrot.slane %v486, %v490
        %493 = vmatprep.subr.mxu0 0.0
        %494 = vmatpush1.msra.mxu0 %v485
        %495 = vmatprep.subr.mxu0 0.0
        %496 = vmatpush1.msra.mxu0 %v484
        %497 = vmatprep.subr.mxu0 0.0
        %498 = vmatpush1.msra.mxu0 %v483
        %499 = vmatprep.subr.mxu0 0.0
        %500 = vmatpush1.msra.mxu0 %v482
        %501 = vmatprep.subr.mxu0 0.0
        %502 = vmatpush1.msra.mxu0 %v481
        %503 = vmatprep.subr.mxu0 0.0
        %504 = vmatpush1.msra.mxu0 %v480
        %505 = vmatprep.subr.mxu0 0.0
        %506 = vmatpush1.msra.mxu0 %v479
        %507 = vmatprep.subr.mxu0 0.0
        %508 = vmatpush1.msra.mxu0 %v478
        %509 = vmatprep.subr.mxu0 0.0
        %510 = vmatpush1.msra.mxu0 %v477
        %511 = vmatprep.subr.mxu0 0.0
        %512 = vmatpush1.msra.mxu0 %v476
        %513 = vmatprep.subr.mxu0 0.0
        %514 = vmatpush1.msra.mxu0 %v475
        %515 = vmatprep.subr.mxu0 0.0
        %516 = vmatpush1.msra.mxu0 %v474
        %517 = vmatprep.subr.mxu0 0.0
        %518 = vmatpush1.msra.mxu0 %v473
        %519 = vmatprep.subr.mxu0 0.0
        %520 = vmatpush1.msra.mxu0 %v472
        %521 = vmatprep.subr.mxu0 0.0
        %522 = vmatpush1.msra.mxu0 %v471
        %523 = vmatprep.subr.mxu0 0.0
        %524 = vmatpush1.msra.mxu0 %v470
        %525 = vmatprep.subr.mxu0 0.0
        %526 = vmatpush2.msra.mxu0 0.0
        %527 = vmatprep.subr.mxu0 0.0
        %528 = vmatpush2.msra.mxu0 0.0
        %529 = vmatprep.subr.mxu0 0.0
        %530 = vmatpush2.msra.mxu0 0.0
        %531 = vmatprep.subr.mxu0 0.0
        %532 = vmatpush2.msra.mxu0 0.0
        %533 = vmatprep.subr.mxu0 0.0
        %534 = vmatpush2.msra.mxu0 0.0
        %535 = vmatprep.subr.mxu0 0.0
        %536 = vmatpush2.msra.mxu0 0.0
        %537 = vmatprep.subr.mxu0 0.0
        %538 = vmatpush2.msra.mxu0 0.0
        %539 = vmatprep.subr.mxu0 0.0
        %540 = vmatpush2.msra.mxu0 0.0
        %541 = vmatprep.subr.mxu0 0.0
        %542 = vmatpush2.msra.mxu0 0.0
        %543 = vmatprep.subr.mxu0 0.0
        %544 = vmatpush2.msra.mxu0 0.0
        %545 = vmatprep.subr.mxu0 0.0
        %546 = vmatpush2.msra.mxu0 0.0
        %547 = vmatprep.subr.mxu0 0.0
        %548 = vmatpush2.msra.mxu0 0.0
        %549 = vmatprep.subr.mxu0 0.0
        %550 = vmatpush2.msra.mxu0 0.0
        %551 = vmatprep.subr.mxu0 0.0
        %552 = vmatpush2.msra.mxu0 0.0
        %553 = vmatprep.subr.mxu0 0.0
        %554 = vmatpush2.msra.mxu0 0.0
        %555 = vmatprep.subr.mxu0 0.0
        %556 = vmatpush2.msra.mxu0 0.0
        %557 = vmatprep.mubr.f32.mxu0 0.0
        %558 = vmatmul.mubr.f32.gmra.mxu0 %v376
        %v559 = vpop.f32.mrf.mxu0
        %v560 = vadd.f32 %v491, %v559
        %v561 = vpop.f32.mrf.mxu0
        %562 = vdwg.mxu0
        %v563 = vld [vmem:[#allocation8] sm:$0xff]
        %v564 = vld [vmem:[#allocation8 + $0x8] sm:$0xff]
        %v565 = vld [vmem:[#allocation8 + $0x10] sm:$0xff]
        %v566 = vld [vmem:[#allocation8 + $0x18] sm:$0xff]
        %v567 = vld [vmem:[#allocation8 + $0x20] sm:$0xff]
        %v568 = vld [vmem:[#allocation8 + $0x28] sm:$0xff]
        %v569 = vld [vmem:[#allocation8 + $0x30] sm:$0xff]
        %v570 = vld [vmem:[#allocation8 + $0x38] sm:$0xff]
        %v571 = vld [vmem:[#allocation8 + $0x40] sm:$0xff]
        %v572 = vld [vmem:[#allocation8 + $0x48] sm:$0xff]
        %v573 = vld [vmem:[#allocation8 + $0x50] sm:$0xff]
        %v574 = vld [vmem:[#allocation8 + $0x58] sm:$0xff]
        %v575 = vld [vmem:[#allocation8 + $0x60] sm:$0xff]
        %v576 = vld [vmem:[#allocation8 + $0x68] sm:$0xff]
        %v577 = vld [vmem:[#allocation8 + $0x70] sm:$0xff]
        %v578 = vld [vmem:[#allocation8 + $0x78] sm:$0xff]
        %v579 = vld [vmem:[%s6] sm:$0x1]
        %v581 = vlaneseq
        %v582 = vshrl.u32 %v581, 7
        %v583 = vsub.s32 0, %v582
        %v584 = vrot.slane %v579, %v583
        %586 = vmatprep.subr.mxu0 0.0
        %587 = vmatpush1.msra.mxu0 %v578
        %588 = vmatprep.subr.mxu0 0.0
        %589 = vmatpush1.msra.mxu0 %v577
        %590 = vmatprep.subr.mxu0 0.0
        %591 = vmatpush1.msra.mxu0 %v576
        %592 = vmatprep.subr.mxu0 0.0
        %593 = vmatpush1.msra.mxu0 %v575
        %594 = vmatprep.subr.mxu0 0.0
        %595 = vmatpush1.msra.mxu0 %v574
        %596 = vmatprep.subr.mxu0 0.0
        %597 = vmatpush1.msra.mxu0 %v573
        %598 = vmatprep.subr.mxu0 0.0
        %599 = vmatpush1.msra.mxu0 %v572
        %600 = vmatprep.subr.mxu0 0.0
        %601 = vmatpush1.msra.mxu0 %v571
        %602 = vmatprep.subr.mxu0 0.0
        %603 = vmatpush1.msra.mxu0 %v570
        %604 = vmatprep.subr.mxu0 0.0
        %605 = vmatpush1.msra.mxu0 %v569
        %606 = vmatprep.subr.mxu0 0.0
        %607 = vmatpush1.msra.mxu0 %v568
        %608 = vmatprep.subr.mxu0 0.0
        %609 = vmatpush1.msra.mxu0 %v567
        %610 = vmatprep.subr.mxu0 0.0
        %611 = vmatpush1.msra.mxu0 %v566
        %612 = vmatprep.subr.mxu0 0.0
        %613 = vmatpush1.msra.mxu0 %v565
        %614 = vmatprep.subr.mxu0 0.0
        %615 = vmatpush1.msra.mxu0 %v564
        %616 = vmatprep.subr.mxu0 0.0
        %617 = vmatpush1.msra.mxu0 %v563
        %618 = vmatprep.subr.mxu0 0.0
        %619 = vmatpush2.msra.mxu0 0.0
        %620 = vmatprep.subr.mxu0 0.0
        %621 = vmatpush2.msra.mxu0 0.0
        %622 = vmatprep.subr.mxu0 0.0
        %623 = vmatpush2.msra.mxu0 0.0
        %624 = vmatprep.subr.mxu0 0.0
        %625 = vmatpush2.msra.mxu0 0.0
        %626 = vmatprep.subr.mxu0 0.0
        %627 = vmatpush2.msra.mxu0 0.0
        %628 = vmatprep.subr.mxu0 0.0
        %629 = vmatpush2.msra.mxu0 0.0
        %630 = vmatprep.subr.mxu0 0.0
        %631 = vmatpush2.msra.mxu0 0.0
        %632 = vmatprep.subr.mxu0 0.0
        %633 = vmatpush2.msra.mxu0 0.0
        %634 = vmatprep.subr.mxu0 0.0
        %635 = vmatpush2.msra.mxu0 0.0
        %636 = vmatprep.subr.mxu0 0.0
        %637 = vmatpush2.msra.mxu0 0.0
        %638 = vmatprep.subr.mxu0 0.0
        %639 = vmatpush2.msra.mxu0 0.0
        %640 = vmatprep.subr.mxu0 0.0
        %641 = vmatpush2.msra.mxu0 0.0
        %642 = vmatprep.subr.mxu0 0.0
        %643 = vmatpush2.msra.mxu0 0.0
        %644 = vmatprep.subr.mxu0 0.0
        %645 = vmatpush2.msra.mxu0 0.0
        %646 = vmatprep.subr.mxu0 0.0
        %647 = vmatpush2.msra.mxu0 0.0
        %648 = vmatprep.subr.mxu0 0.0
        %649 = vmatpush2.msra.mxu0 0.0
        %650 = vmatprep.mubr.f32.mxu0 0.0
        %651 = vmatmul.mubr.f32.gmra.mxu0 %v376
        %v652 = vpop.f32.mrf.mxu0
        %v653 = vadd.f32 %v584, %v652
        %v654 = vpop.f32.mrf.mxu0
        %655 = vdwg.mxu0
        %656 = vmatprep.subr.mxu0 0.0
        %657 = vmatpush1.xpose.msra.mxu0 0.0
        %658 = vmatprep.subr.mxu0 0.0
        %659 = vmatpush1.xpose.msra.mxu0 0.0
        %660 = vmatprep.subr.mxu0 0.0
        %661 = vmatpush1.xpose.msra.mxu0 0.0
        %662 = vmatprep.subr.mxu0 0.0
        %663 = vmatpush1.xpose.msra.mxu0 0.0
        %664 = vmatprep.subr.mxu0 0.0
        %665 = vmatpush1.xpose.msra.mxu0 0.0
        %666 = vmatprep.subr.mxu0 0.0
        %667 = vmatpush1.xpose.msra.mxu0 0.0
        %668 = vmatprep.subr.mxu0 0.0
        %669 = vmatpush1.xpose.msra.mxu0 0.0
        %670 = vmatprep.subr.mxu0 0.0
        %671 = vmatpush1.xpose.msra.mxu0 0.0
        %672 = vmatprep.subr.mxu0 0.0
        %673 = vmatpush1.xpose.msra.mxu0 0.0
        %674 = vmatprep.subr.mxu0 0.0
        %675 = vmatpush1.xpose.msra.mxu0 0.0
        %676 = vmatprep.subr.mxu0 0.0
        %677 = vmatpush1.xpose.msra.mxu0 0.0
        %678 = vmatprep.subr.mxu0 0.0
        %679 = vmatpush1.xpose.msra.mxu0 0.0
        %680 = vmatprep.subr.mxu0 0.0
        %681 = vmatpush1.xpose.msra.mxu0 0.0
        %682 = vmatprep.subr.mxu0 0.0
        %683 = vmatpush1.xpose.msra.mxu0 0.0
        %684 = vmatprep.subr.mxu0 0.0
        %685 = vmatpush1.xpose.msra.mxu0 0.0
        %686 = vmatprep.subr.mxu0 0.0
        %687 = vmatpush1.xpose.msra.mxu0 %v560
        %688 = vmatprep.subr.mxu0 0.0
        %689 = vmatpush2.xpose.msra.mxu0 0.0
        %690 = vmatprep.subr.mxu0 0.0
        %691 = vmatpush2.xpose.msra.mxu0 0.0
        %692 = vmatprep.subr.mxu0 0.0
        %693 = vmatpush2.xpose.msra.mxu0 0.0
        %694 = vmatprep.subr.mxu0 0.0
        %695 = vmatpush2.xpose.msra.mxu0 0.0
        %696 = vmatprep.subr.mxu0 0.0
        %697 = vmatpush2.xpose.msra.mxu0 0.0
        %698 = vmatprep.subr.mxu0 0.0
        %699 = vmatpush2.xpose.msra.mxu0 0.0
        %700 = vmatprep.subr.mxu0 0.0
        %701 = vmatpush2.xpose.msra.mxu0 0.0
        %702 = vmatprep.subr.mxu0 0.0
        %703 = vmatpush2.xpose.msra.mxu0 0.0
        %704 = vmatprep.subr.mxu0 0.0
        %705 = vmatpush2.xpose.msra.mxu0 0.0
        %706 = vmatprep.subr.mxu0 0.0
        %707 = vmatpush2.xpose.msra.mxu0 0.0
        %708 = vmatprep.subr.mxu0 0.0
        %709 = vmatpush2.xpose.msra.mxu0 0.0
        %710 = vmatprep.subr.mxu0 0.0
        %711 = vmatpush2.xpose.msra.mxu0 0.0
        %712 = vmatprep.subr.mxu0 0.0
        %713 = vmatpush2.xpose.msra.mxu0 0.0
        %714 = vmatprep.subr.mxu0 0.0
        %715 = vmatpush2.xpose.msra.mxu0 0.0
        %716 = vmatprep.subr.mxu0 0.0
        %717 = vmatpush2.xpose.msra.mxu0 0.0
        %718 = vmatprep.subr.mxu0 0.0
        %719 = vmatpush2.xpose.msra.mxu0 0.0
        %720 = vmatprep.mubr.f32.mxu0 0.0
        %721 = vmatmul.mubr.f32.gmra.mxu0 %v467
        %v722 = vpop.f32.mrf.mxu0
        %v723 = vadd.f32 0.0, %v722
        %v724 = vpop.f32.mrf.mxu0
        %725 = vdwg.mxu0
        %v726 = vmul.f32 %v723, 0.17677669
        %vm727 = vcmask 64512
        %v728 = vsel %vm727, %v726, -inf
        %729 = vmax.xlane.f32.xlu0 %v728
        %v730 = vpop.xlane.xlu0 %729
        %v731 = vsub.f32 %v726, %v730
        %v732 = vmul.f32 %v731, 1.442695
        %v733 = vpow.pop %v732
        %v734 = vsel %vm727, %v733, 0.0
        %735 = vadd.xlane.f32.xlu0 %v734
        %v736 = vpop.xlane.xlu0 %735
        %v737 = vrcp.pop %v736
        %v738 = vmul.f32 %v733, %v737
        %v740 = vsel %vm727, %v738, 0
        %742 = vmatprep.subr.mxu0 0.0
        %743 = vmatpush1.msra.mxu0 0.0
        %744 = vmatprep.subr.mxu0 0.0
        %745 = vmatpush1.msra.mxu0 0.0
        %746 = vmatprep.subr.mxu0 0.0
        %747 = vmatpush1.msra.mxu0 0.0
        %748 = vmatprep.subr.mxu0 0.0
        %749 = vmatpush1.msra.mxu0 0.0
        %750 = vmatprep.subr.mxu0 0.0
        %751 = vmatpush1.msra.mxu0 0.0
        %752 = vmatprep.subr.mxu0 0.0
        %753 = vmatpush1.msra.mxu0 0.0
        %754 = vmatprep.subr.mxu0 0.0
        %755 = vmatpush1.msra.mxu0 0.0
        %756 = vmatprep.subr.mxu0 0.0
        %757 = vmatpush1.msra.mxu0 0.0
        %758 = vmatprep.subr.mxu0 0.0
        %759 = vmatpush1.msra.mxu0 0.0
        %760 = vmatprep.subr.mxu0 0.0
        %761 = vmatpush1.msra.mxu0 0.0
        %762 = vmatprep.subr.mxu0 0.0
        %763 = vmatpush1.msra.mxu0 0.0
        %764 = vmatprep.subr.mxu0 0.0
        %765 = vmatpush1.msra.mxu0 0.0
        %766 = vmatprep.subr.mxu0 0.0
        %767 = vmatpush1.msra.mxu0 0.0
        %768 = vmatprep.subr.mxu0 0.0
        %769 = vmatpush1.msra.mxu0 0.0
        %770 = vmatprep.subr.mxu0 0.0
        %771 = vmatpush1.msra.mxu0 0.0
        %772 = vmatprep.subr.mxu0 0.0
        %773 = vmatpush1.msra.mxu0 %v653
        %774 = vmatprep.subr.mxu0 0.0
        %775 = vmatpush2.msra.mxu0 0.0
        %776 = vmatprep.subr.mxu0 0.0
        %777 = vmatpush2.msra.mxu0 0.0
        %778 = vmatprep.subr.mxu0 0.0
        %779 = vmatpush2.msra.mxu0 0.0
        %780 = vmatprep.subr.mxu0 0.0
        %781 = vmatpush2.msra.mxu0 0.0
        %782 = vmatprep.subr.mxu0 0.0
        %783 = vmatpush2.msra.mxu0 0.0
        %784 = vmatprep.subr.mxu0 0.0
        %785 = vmatpush2.msra.mxu0 0.0
        %786 = vmatprep.subr.mxu0 0.0
        %787 = vmatpush2.msra.mxu0 0.0
        %788 = vmatprep.subr.mxu0 0.0
        %789 = vmatpush2.msra.mxu0 0.0
        %790 = vmatprep.subr.mxu0 0.0
        %791 = vmatpush2.msra.mxu0 0.0
        %792 = vmatprep.subr.mxu0 0.0
        %793 = vmatpush2.msra.mxu0 0.0
        %794 = vmatprep.subr.mxu0 0.0
        %795 = vmatpush2.msra.mxu0 0.0
        %796 = vmatprep.subr.mxu0 0.0
        %797 = vmatpush2.msra.mxu0 0.0
        %798 = vmatprep.subr.mxu0 0.0
        %799 = vmatpush2.msra.mxu0 0.0
        %800 = vmatprep.subr.mxu0 0.0
        %801 = vmatpush2.msra.mxu0 0.0
        %802 = vmatprep.subr.mxu0 0.0
        %803 = vmatpush2.msra.mxu0 0.0
        %804 = vmatprep.subr.mxu0 0.0
        %805 = vmatpush2.msra.mxu0 0.0
        %806 = vmatprep.mubr.f32.mxu0 0.0
        %807 = vmatmul.mubr.f32.gmra.mxu0 %v740
        %v808 = vpop.f32.mrf.mxu0
        %v809 = vadd.f32 0.0, %v808
        %v810 = vpop.f32.mrf.mxu0
        %811 = vdwg.mxu0
        %812 = vst [vmem:[%s368] sm:$0xff] %v809
        %813 = vst.msk [vmem:[%s375] sm:$0xff] %vm727, %v738
        %s814 = sand.u32 %s191, 1
        %s815 = scalar_lea.sflag [#allocation4], %s814
        %s816 = sand.u32 %s191, 1
        %s817 = smul.addr %s816, 8
        %s818 = scalar_lea.vmem [#allocation10], %s817
        %s819 = sand.u32 %s217, 1
        %s820 = scalar_lea.sflag [#allocation12], %s819
        %s821 = sand.u32 %s217, 1
        %s822 = smul.addr %s821, 8
        %s823 = scalar_lea.vmem [#allocation11], %s822
        // Predicated region
        $region65: #{tpu_custom_call.1} parent=47 // pred_check
          %p824 = pneg %p201
        $region66: #{tpu_custom_call.1} parent=47 // pred_check_branch
          %826 = sbr.rel (%p824) target = $region68
        $region67: #{tpu_custom_call.1} parent=47 // pred_region
          %s828 = ssub.s32 128, 128
          %829 = vsyncadd %s815, %s828
          %s830 = smul.addr %s31, 128
          %s831 = scalar_lea.hbm %s7, %s830
          %s833 = sshll.u32 %s818, 4
          %s834 = int_to_ptr.vmem [resolvable:$true] %s833
          %836 = dma.vmem_to_hbm [thread:$0]  %s834, 128, %s831, %s815
        $region68: #{tpu_custom_call.1} parent=47 // pred_fallthru
          _
        // Predicated region
        $region69: #{tpu_custom_call.1} parent=47 // pred_check
          %p837 = pneg %p227
        $region70: #{tpu_custom_call.1} parent=47 // pred_check_branch
          %839 = sbr.rel (%p837) target = $region72
        $region71: #{tpu_custom_call.1} parent=47 // pred_region
          %s841 = ssub.s32 128, 128
          %842 = vsyncadd %s820, %s841
          %s843 = smul.addr %s31, 128
          %s844 = scalar_lea.hbm %s8, %s843
          %s846 = sshll.u32 %s823, 4
          %s847 = int_to_ptr.vmem [resolvable:$true] %s846
          %849 = dma.vmem_to_hbm [thread:$0]  %s847, 128, %s844, %s820
        $region72: #{tpu_custom_call.1} parent=47 // pred_fallthru
          _
      $region48: #{tpu_custom_call.1} parent=5 // pred_fallthru
        _
      %p850 = scmp.le.s32.totalorder 2, %s26
      // Predicated region
      $region73: #{tpu_custom_call.1} parent=5 // pred_check
        %p851 = pneg %p850
      $region74: #{tpu_custom_call.1} parent=5 // pred_check_branch
        %853 = sbr.rel (%p851) target = $region76
      $region75: #{tpu_custom_call.1} parent=5 // pred_region
        %s854 = ssub.s32 %s26, 2
        // Predicated region
        $region77: #{tpu_custom_call.1} parent=75 // pred_check
          %p855 = pneg %p207
        $region78: #{tpu_custom_call.1} parent=75 // pred_check_branch
          %857 = sbr.rel (%p855) target = $region80
        $region79: #{tpu_custom_call.1} parent=75 // pred_region
          %s858 = sand.u32 %s192, 1
          %s859 = scalar_lea.sflag [#allocation4], %s858
          %s860 = sand.u32 %s192, 1
          %s861 = smul.addr %s860, 8
          %s862 = scalar_lea.vmem [#allocation10], %s861
          %863 = dma.done %s859, 128
        $region80: #{tpu_custom_call.1} parent=75 // pred_fallthru
          _
        // Predicated region
        $region81: #{tpu_custom_call.1} parent=75 // pred_check
          %p864 = pneg %p233
        $region82: #{tpu_custom_call.1} parent=75 // pred_check_branch
          %866 = sbr.rel (%p864) target = $region84
        $region83: #{tpu_custom_call.1} parent=75 // pred_region
          %s867 = sand.u32 %s218, 1
          %s868 = scalar_lea.sflag [#allocation12], %s867
          %s869 = sand.u32 %s218, 1
          %s870 = smul.addr %s869, 8
          %s871 = scalar_lea.vmem [#allocation11], %s870
          %872 = dma.done %s868, 128
        $region84: #{tpu_custom_call.1} parent=75 // pred_fallthru
          _
      $region76: #{tpu_custom_call.1} parent=5 // pred_fallthru
        _
    $region6: #{tpu_custom_call.1} parent=1 // loop_footer
      %s30 = sadd.s32 1, %s26
    $region7: #{tpu_custom_call.1} parent=1 // loop_footer_branch
      %25 = sbr.rel target = $region3
    $region8: #{tpu_custom_call.1} parent=1 // loop_exit
      _
    %873 = vsyncpa [#allocation3], 1
    %s874 = scalar_lea.sflag [#allocation3], 1
    %875 = vsyncpa %s874, 1
    %876 = vsyncpa [#allocation6], 1
    %877 = vsyncpa [#allocation9], 1
    %878 = vsyncpa [#allocation4], 1
    %s879 = scalar_lea.sflag [#allocation4], 1
    %880 = vsyncpa %s879, 1
    %881 = vsyncpa [#allocation12], 1
    %s882 = scalar_lea.sflag [#allocation12], 1
    %883 = vsyncpa %s882, 1

</llo_original>
